<compile_context>
chip_gen: v6e
topology: v6e:2x2x1
jax: 0.10.0
libtpu: 0.0.40
codegen_flags: <defaults>
</compile_context>

<pallas_src>
import jax
import jax.numpy as jnp
from jax.experimental import pallas as pl
from jax.experimental.pallas import tpu as pltpu

HIDDEN = 128


def mlp_kernel(x_ref, p_ref, w23_ref, o_ref):
    # x_ref:   (TB, 1)  f32   batch tile
    # p_ref:   (8, 128) f32   rows = [w1, b1, b2, b3, w4, pad, pad, pad]
    # w23_ref: (128, 256) bf16  columns = [w2 | w3]
    # o_ref:   (TB, 1)  f32
    x = x_ref[...]                                   # (TB, 1)
    p = p_ref[...]                                   # (8, 128) single vreg slab
    w1 = p[0:1, :]
    b1 = p[1:2, :]
    b2 = p[2:3, :]
    b3 = p[3:4, :]
    w4 = p[4:5, :]

    # --- Layer 1: rank-1 outer product -> pure VPU broadcast multiply.
    h = jnp.maximum(x * w1 + b1, 0.0)                # (TB, 128) f32

    # --- Layers 2 & 3: bf16 MXU matmuls, f32 accumulation, f32 bias/ReLU.
    w23 = w23_ref[...]                               # (128, 256) bf16
    w2 = w23[:, :HIDDEN]
    w3 = w23[:, HIDDEN:]

    h = jnp.dot(h.astype(jnp.bfloat16), w2,
                preferred_element_type=jnp.float32) + b2
    h = jnp.maximum(h, 0.0)

    h = jnp.dot(h.astype(jnp.bfloat16), w3,
                preferred_element_type=jnp.float32) + b3
    h = jnp.maximum(h, 0.0)

    # --- Layer 4: N=1 matmul -> VPU multiply + XLU lane reduction (exact f32).
    out = jnp.sum(h * w4, axis=-1, keepdims=True)    # (TB, 1)
    o_ref[...] = out.astype(o_ref.dtype)


def _round_up(n, m):
    return ((n + m - 1) // m) * m


def _pack_params(params):
    """Wrapper-side layout plumbing: one (8,128) f32 slab + one (128,256) bf16 slab."""
    w1, b1, w2, b2, w3, b3, w4 = params
    small = jnp.concatenate(
        [w1.reshape(1, HIDDEN),
         b1.reshape(1, HIDDEN),
         b2.reshape(1, HIDDEN),
         b3.reshape(1, HIDDEN),
         w4.reshape(1, HIDDEN),
         jnp.zeros((3, HIDDEN), jnp.float32)],       # pad to 8 sublanes
        axis=0)                                      # (8, 128) f32
    w23 = jnp.concatenate([w2, w3], axis=1).astype(jnp.bfloat16)  # (128, 256)
    return small, w23


def mlp_forward(x, params, block_b=512):
    small, w23 = _pack_params(params)
    B = x.shape[0]

    # Batch tile: multiple of 8 (sublane granularity), capped at block_b.
    tb = min(block_b, _round_up(B, 8))
    b_pad = _round_up(B, tb)
    if b_pad != B:
        x = jnp.pad(x, ((0, b_pad - B), (0, 0)))

    grid = (b_pad // tb,)

    out = pl.pallas_call(
        mlp_kernel,
        out_shape=jax.ShapeDtypeStruct((b_pad, 1), jnp.float32),
        grid=grid,
        in_specs=[
            pl.BlockSpec((tb, 1), lambda i: (i, 0)),            # x (batch-tiled)
            pl.BlockSpec((8, HIDDEN), lambda i: (0, 0)),        # packed vectors
            pl.BlockSpec((HIDDEN, 2 * HIDDEN), lambda i: (0, 0)),  # w2|w3 bf16
        ],
        out_specs=pl.BlockSpec((tb, 1), lambda i: (i, 0)),
        compiler_params=pltpu.CompilerParams(
            dimension_semantics=("parallel",)),                 # 2 TCs on v7x
    )(x, small, w23)

    return out[:B]


def init_params(key):
    """PyTorch-style uniform(-1/sqrt(fan_in), 1/sqrt(fan_in)) init."""
    ks = jax.random.split(key, 7)

    def lin(kw, kb, fan_in, fan_out, bias=True):
        bound = 1.0 / jnp.sqrt(fan_in)
        w = jax.random.uniform(kw, (fan_in, fan_out), jnp.float32, -bound, bound)
        b = (jax.random.uniform(kb, (1, fan_out), jnp.float32, -bound, bound)
             if bias else None)
        return w, b

    w1, b1 = lin(ks[0], ks[1], 1, HIDDEN)
    w2, b2 = lin(ks[2], ks[3], HIDDEN, HIDDEN)
    w3, b3 = lin(ks[4], ks[5], HIDDEN, HIDDEN)
    w4, _ = lin(ks[6], ks[6], HIDDEN, 1, bias=False)   # fc4 has bias=False
    return (w1, b1, w2, b2, w3, b3, w4)


def reference_forward_f32(x, params):
    """Pure-f32 semantic reference (the original PyTorch forward)."""
    w1, b1, w2, b2, w3, b3, w4 = params
    h = jnp.maximum(x @ w1 + b1, 0.0)
    h = jnp.maximum(h @ w2 + b2, 0.0)
    h = jnp.maximum(h @ w3 + b3, 0.0)
    return h @ w4


def reference_forward_mixed(x, params):
    """Reference mimicking the kernel's numerics (bf16 dot inputs, f32 acc)."""
    w1, b1, w2, b2, w3, b3, w4 = params
    h = jnp.maximum(x * w1 + b1, 0.0)
    h = jnp.maximum(
        jnp.dot(h.astype(jnp.bfloat16), w2.astype(jnp.bfloat16),
                preferred_element_type=jnp.float32) + b2, 0.0)
    h = jnp.maximum(
        jnp.dot(h.astype(jnp.bfloat16), w3.astype(jnp.bfloat16),
                preferred_element_type=jnp.float32) + b3, 0.0)
    return jnp.sum(h * w4.reshape(1, HIDDEN), axis=-1, keepdims=True)


if __name__ == "__main__":
    key = jax.random.PRNGKey(0)
    k_x, k_p = jax.random.split(key)

    B = 8
    x = jax.random.uniform(k_x, (B, 1), jnp.float32, 0.0, 2.0 * jnp.pi)
    params = init_params(k_p)

    out = mlp_forward(x, params)
    out = jax.block_until_ready(out)
    assert out.shape == (B, 1)

    # Tight check against a reference with identical numerics (bf16 matmuls).
    ref_mixed = reference_forward_mixed(x, params)
    assert jnp.allclose(out, ref_mixed, atol=1e-4, rtol=1e-4)

    # Loose check against the full-f32 semantic reference (bf16 weight error).
    ref_f32 = reference_forward_f32(x, params)
    assert jnp.allclose(out, ref_f32, atol=5e-2, rtol=5e-2)

    print("KERNEL_OK")
</pallas_src>

<mosaic_0001>
module attributes {stable_mosaic.version = 11 : i64} {
  func.func @mlp_kernel(%arg0: i32, %arg1: memref<8x1xf32, #tpu.memory_space<vmem>>, %arg2: memref<8x128xf32, #tpu.memory_space<vmem>>, %arg3: memref<128x256xbf16, #tpu.memory_space<vmem>>, %arg4: memref<8x1xf32, #tpu.memory_space<vmem>>) attributes {dimension_semantics = [#tpu.dimension_semantics<parallel>], iteration_bounds = array<i64: 1>, scalar_prefetch = 0 : i64, scratch_operands = 0 : i64, tpu.core_type = #tpu.core_type<tc>, window_params = [{transform_indices = @transform_0, window_bounds = array<i64: 8, 1>}, {pipeline_mode = #tpu.pipeline_mode<synchronous>, transform_indices = @transform_1, window_bounds = array<i64: 8, 128>}, {pipeline_mode = #tpu.pipeline_mode<synchronous>, transform_indices = @transform_2, window_bounds = array<i64: 128, 256>}, {transform_indices = @transform_3, window_bounds = array<i64: 8, 1>}]} {
    %c0 = arith.constant 0 : index
    %c0_0 = arith.constant 0 : index
    %0 = vector.load %arg1[%c0, %c0_0] : memref<8x1xf32, #tpu.memory_space<vmem>>, vector<8x1xf32>
    %c0_1 = arith.constant 0 : index
    %c0_2 = arith.constant 0 : index
    %1 = vector.load %arg2[%c0_1, %c0_2] : memref<8x128xf32, #tpu.memory_space<vmem>>, vector<8x128xf32>
    %2 = vector.extract_strided_slice %1 {offsets = [0, 0], sizes = [1, 128], strides = [1, 1]} : vector<8x128xf32> to vector<1x128xf32>
    %3 = vector.extract_strided_slice %1 {offsets = [1, 0], sizes = [1, 128], strides = [1, 1]} : vector<8x128xf32> to vector<1x128xf32>
    %4 = vector.extract_strided_slice %1 {offsets = [2, 0], sizes = [1, 128], strides = [1, 1]} : vector<8x128xf32> to vector<1x128xf32>
    %5 = vector.extract_strided_slice %1 {offsets = [3, 0], sizes = [1, 128], strides = [1, 1]} : vector<8x128xf32> to vector<1x128xf32>
    %6 = vector.extract_strided_slice %1 {offsets = [4, 0], sizes = [1, 128], strides = [1, 1]} : vector<8x128xf32> to vector<1x128xf32>
    %7 = vector.broadcast %0 : vector<8x1xf32> to vector<8x128xf32>
    %8 = vector.broadcast %2 : vector<1x128xf32> to vector<8x128xf32>
    %9 = arith.mulf %7, %8 : vector<8x128xf32>
    %10 = vector.broadcast %3 : vector<1x128xf32> to vector<8x128xf32>
    %11 = arith.addf %9, %10 : vector<8x128xf32>
    %cst = arith.constant 0.000000e+00 : f32
    %12 = vector.broadcast %cst : f32 to vector<8x128xf32>
    %13 = arith.maximumf %11, %12 : vector<8x128xf32>
    %c0_3 = arith.constant 0 : index
    %c0_4 = arith.constant 0 : index
    %14 = vector.load %arg3[%c0_3, %c0_4] : memref<128x256xbf16, #tpu.memory_space<vmem>>, vector<128x256xbf16>
    %15 = vector.extract_strided_slice %14 {offsets = [0, 0], sizes = [128, 128], strides = [1, 1]} : vector<128x256xbf16> to vector<128x128xbf16>
    %16 = vector.extract_strided_slice %14 {offsets = [0, 128], sizes = [128, 128], strides = [1, 1]} : vector<128x256xbf16> to vector<128x128xbf16>
    %17 = arith.truncf %13 : vector<8x128xf32> to vector<8x128xbf16>
    %cst_5 = arith.constant dense<0.000000e+00> : vector<8x128xf32>
    %18 = tpu.matmul %17, %15, %cst_5 {dimension_numbers = #tpu.dot_dimension_numbers<[1], [0], [0], [1], [0, 0, 1, 1], [], []>} : vector<8x128xbf16>, vector<128x128xbf16>, vector<8x128xf32> -> vector<8x128xf32>
    %19 = vector.broadcast %4 : vector<1x128xf32> to vector<8x128xf32>
    %20 = arith.addf %18, %19 : vector<8x128xf32>
    %cst_6 = arith.constant 0.000000e+00 : f32
    %21 = vector.broadcast %cst_6 : f32 to vector<8x128xf32>
    %22 = arith.maximumf %20, %21 : vector<8x128xf32>
    %23 = arith.truncf %22 : vector<8x128xf32> to vector<8x128xbf16>
    %cst_7 = arith.constant dense<0.000000e+00> : vector<8x128xf32>
    %24 = tpu.matmul %23, %16, %cst_7 {dimension_numbers = #tpu.dot_dimension_numbers<[1], [0], [0], [1], [0, 0, 1, 1], [], []>} : vector<8x128xbf16>, vector<128x128xbf16>, vector<8x128xf32> -> vector<8x128xf32>
    %25 = vector.broadcast %5 : vector<1x128xf32> to vector<8x128xf32>
    %26 = arith.addf %24, %25 : vector<8x128xf32>
    %cst_8 = arith.constant 0.000000e+00 : f32
    %27 = vector.broadcast %cst_8 : f32 to vector<8x128xf32>
    %28 = arith.maximumf %26, %27 : vector<8x128xf32>
    %29 = vector.broadcast %6 : vector<1x128xf32> to vector<8x128xf32>
    %30 = arith.mulf %28, %29 : vector<8x128xf32>
    %cst_9 = arith.constant dense<0.000000e+00> : vector<8xf32>
    %31 = vector.multi_reduction <add>, %30, %cst_9 [1] : vector<8x128xf32> to vector<8xf32>
    %32 = vector.shape_cast %31 : vector<8xf32> to vector<8x1xf32>
    %c0_10 = arith.constant 0 : index
    %c0_11 = arith.constant 0 : index
    %33 = vector.load %arg4[%c0_10, %c0_11] : memref<8x1xf32, #tpu.memory_space<vmem>>, vector<8x1xf32>
    tpu.vector_store %arg4[%c0_10, %c0_11], %32 {strides = array<i32>} : memref<8x1xf32, #tpu.memory_space<vmem>>, vector<8x1xf32>,
    return
  }
  func.func @transform_0(%arg0: i32) -> (i32, i32) {
    %c0_i32 = arith.constant 0 : i32
    %c0_i32_0 = arith.constant 0 : i32
    return %arg0, %c0_i32 : i32, i32
  }
  func.func @transform_1(%arg0: i32) -> (i32, i32) {
    %c0_i32 = arith.constant 0 : i32
    %c0_i32_0 = arith.constant 0 : i32
    %c0_i32_1 = arith.constant 0 : i32
    return %c0_i32, %c0_i32_0 : i32, i32
  }
  func.func @transform_2(%arg0: i32) -> (i32, i32) {
    %c0_i32 = arith.constant 0 : i32
    %c0_i32_0 = arith.constant 0 : i32
    %c0_i32_1 = arith.constant 0 : i32
    return %c0_i32, %c0_i32_0 : i32, i32
  }
  func.func @transform_3(%arg0: i32) -> (i32, i32) {
    %c0_i32 = arith.constant 0 : i32
    %c0_i32_0 = arith.constant 0 : i32
    return %arg0, %c0_i32 : i32, i32
  }
}

</mosaic_0001>

<llo_original>
// kernel: tpu_custom_call.1
$region0: #{tpu_custom_call.1}
  #allocation0 [shape = 'u32[]', space=smem, size = 0x4, offset = 0x4, fixed_abs, tag = 'smem constant byte address 0x4 - core index']
  #allocation1 [shape = 'u32[144,128]{1,0:T(1,128)}', space=vmem, size = 0x12000, scoped, tag = 'internal scratch']
  %s0 = inlined_call_operand.vmem [shape: f32[8,1], index: 0, kind: input, shape index: {}]
  %s1 = inlined_call_operand.vmem [shape: f32[8,128], index: 1, kind: input, shape index: {}]
  %s2 = inlined_call_operand.hbm [shape: bf16[128,256], index: 2, kind: input, shape index: {}]
  %s3 = inlined_call_operand.vmem [shape: f32[8,1], index: 3, kind: output, shape index: {}]
  %s4 = sld [smem:[#allocation0]]
  $region26: #{tpu_custom_call.1} parent=0
    _
  %s6 = ssub.s32 1, %s4
  %s7 = scalar_select 0, %s6, %s4
  $region1: #{tpu_custom_call.1} parent=0
    #allocation2 [shape = 'u8[65536]{0}', space=vmem, size = 0x10000, scoped, tag = 'input window, operand 2, single buffered']
    #allocation3 [shape = 's32[1]{0}', space=sflag, size = 0x4, scoped, tag = 'scoped memory for tpu_custom_call.1']
    %8 = vsyncpa [#allocation3], 0
    // Predicated region
    $region2: #{tpu_custom_call.1} parent=1 // pred_check
      _
    $region3: #{tpu_custom_call.1} parent=1 // pred_check_branch
      %10 = sbr.rel (0) target = $region5
    $region4: #{tpu_custom_call.1} parent=1 // pred_region
      _
    $region5: #{tpu_custom_call.1} parent=1 // pred_fallthru
      _
    // Predicated region
    $region6: #{tpu_custom_call.1} parent=1 // pred_check
      _
    $region7: #{tpu_custom_call.1} parent=1 // pred_check_branch
      %12 = sbr.rel (0) target = $region9
    $region8: #{tpu_custom_call.1} parent=1 // pred_region
      _
    $region9: #{tpu_custom_call.1} parent=1 // pred_fallthru
      _
    // Predicated region
    $region10: #{tpu_custom_call.1} parent=1 // pred_check
      _
    $region11: #{tpu_custom_call.1} parent=1 // pred_check_branch
      %14 = sbr.rel (0) target = $region13
    $region12: #{tpu_custom_call.1} parent=1 // pred_region
      %s16 = ssub.s32 2048, 2048
      %17 = vsyncadd [#allocation3], %s16
      %s18 = sshll.u32 [#allocation2], 4
      %s19 = int_to_ptr.vmem [resolvable:$true] %s18
      %24 = dma.hbm_to_vmem [thread:$0]  %s2, 2048, %s19, [#allocation3], 128, 128, 8
    $region13: #{tpu_custom_call.1} parent=1 // pred_fallthru
      _
    // Predicated region
    $region14: #{tpu_custom_call.1} parent=1 // pred_check
      _
    $region15: #{tpu_custom_call.1} parent=1 // pred_check_branch
      %26 = sbr.rel (0) target = $region17
    $region16: #{tpu_custom_call.1} parent=1 // pred_region
      %27 = dma.done [#allocation3], 2048
    $region17: #{tpu_custom_call.1} parent=1 // pred_fallthru
      _
    %v29 = vld [vmem:[%s0] sm:$0xff]
    %v30 = vld [vmem:[%s1] sm:$0xff]
    %32 = vset.pattern.permute.xlu0 0
    %33 = vperm.xlu0 %32, %v29
    %v34 = vpop.permute.xlu0 %33
    %v36 = vlaneseq
    %v37 = vshrl.u32 %v36, 7
    %v38 = vsub.s32 0, %v37
    %v39 = vrot.slane %v30, %v38
    %v40 = vmul.f32 %v34, %v39
    %v41 = vlaneseq
    %v42 = vshrl.u32 %v41, 7
    %v43 = vsub.s32 1, %v42
    %v44 = vrot.slane %v30, %v43
    %v45 = vadd.f32 %v40, %v44
    %v46 = vmax.f32 %v45, 0.0
    %v47 = vld [vmem:[#allocation2] sm:$0xff]
    %v48 = vld [vmem:[#allocation2 + $0x8] sm:$0xff]
    %v49 = vld [vmem:[#allocation2 + $0x10] sm:$0xff]
    %v50 = vld [vmem:[#allocation2 + $0x18] sm:$0xff]
    %v51 = vld [vmem:[#allocation2 + $0x20] sm:$0xff]
    %v52 = vld [vmem:[#allocation2 + $0x28] sm:$0xff]
    %v53 = vld [vmem:[#allocation2 + $0x30] sm:$0xff]
    %v54 = vld [vmem:[#allocation2 + $0x38] sm:$0xff]
    %v55 = vld [vmem:[#allocation2 + $0x40] sm:$0xff]
    %v56 = vld [vmem:[#allocation2 + $0x48] sm:$0xff]
    %v57 = vld [vmem:[#allocation2 + $0x50] sm:$0xff]
    %v58 = vld [vmem:[#allocation2 + $0x58] sm:$0xff]
    %v59 = vld [vmem:[#allocation2 + $0x60] sm:$0xff]
    %v60 = vld [vmem:[#allocation2 + $0x68] sm:$0xff]
    %v61 = vld [vmem:[#allocation2 + $0x70] sm:$0xff]
    %v62 = vld [vmem:[#allocation2 + $0x78] sm:$0xff]
    %v63 = vpack.c.bf16 %v46, %v46
    %v64 = vlaneseq
    %v65 = vshrl.u32 %v64, 7
    %v66 = vsub.s32 2, %v65
    %v67 = vrot.slane %v30, %v66
    %v84 = vunpack.c.l.b16 %v47
    %v85 = vunpack.c.l.b16 %v48
    %v86 = vunpack.c.l.b16 %v49
    %v87 = vunpack.c.l.b16 %v50
    %v88 = vunpack.c.l.b16 %v51
    %v89 = vunpack.c.l.b16 %v52
    %v90 = vunpack.c.l.b16 %v53
    %v91 = vunpack.c.l.b16 %v54
    %v92 = vunpack.c.l.b16 %v55
    %v93 = vunpack.c.l.b16 %v56
    %v94 = vunpack.c.l.b16 %v57
    %v95 = vunpack.c.l.b16 %v58
    %v96 = vunpack.c.l.b16 %v59
    %v97 = vunpack.c.l.b16 %v60
    %v98 = vunpack.c.l.b16 %v61
    %v99 = vunpack.c.l.b16 %v62
    %v100 = vpack.c.b16 %v85, %v84
    %v101 = vpack.c.b16 %v87, %v86
    %v102 = vpack.c.b16 %v89, %v88
    %v103 = vpack.c.b16 %v91, %v90
    %v104 = vpack.c.b16 %v93, %v92
    %v105 = vpack.c.b16 %v95, %v94
    %v106 = vpack.c.b16 %v97, %v96
    %v107 = vpack.c.b16 %v99, %v98
    %116 = vmatprep.subr.bf16.mxu0 0
    %117 = vmatpush1.bf16.msra.mxu0 %v107
    %118 = vmatprep.subr.bf16.mxu0 0
    %119 = vmatpush1.bf16.msra.mxu0 %v106
    %120 = vmatprep.subr.bf16.mxu0 0
    %121 = vmatpush1.bf16.msra.mxu0 %v105
    %122 = vmatprep.subr.bf16.mxu0 0
    %123 = vmatpush1.bf16.msra.mxu0 %v104
    %124 = vmatprep.subr.bf16.mxu0 0
    %125 = vmatpush1.bf16.msra.mxu0 %v103
    %126 = vmatprep.subr.bf16.mxu0 0
    %127 = vmatpush1.bf16.msra.mxu0 %v102
    %128 = vmatprep.subr.bf16.mxu0 0
    %129 = vmatpush1.bf16.msra.mxu0 %v101
    %130 = vmatprep.subr.bf16.mxu0 0
    %131 = vmatpush1.bf16.msra.mxu0 %v100
    %132 = vmatprep.subr.bf16.mxu0 0
    %133 = vmatpush2.bf16.msra.mxu0 0
    %134 = vmatprep.subr.bf16.mxu0 0
    %135 = vmatpush2.bf16.msra.mxu0 0
    %136 = vmatprep.subr.bf16.mxu0 0
    %137 = vmatpush2.bf16.msra.mxu0 0
    %138 = vmatprep.subr.bf16.mxu0 0
    %139 = vmatpush2.bf16.msra.mxu0 0
    %140 = vmatprep.subr.bf16.mxu0 0
    %141 = vmatpush2.bf16.msra.mxu0 0
    %142 = vmatprep.subr.bf16.mxu0 0
    %143 = vmatpush2.bf16.msra.mxu0 0
    %144 = vmatprep.subr.bf16.mxu0 0
    %145 = vmatpush2.bf16.msra.mxu0 0
    %146 = vmatprep.subr.bf16.mxu0 0
    %147 = vmatpush2.bf16.msra.mxu0 0
    %148 = vmatprep.mubr.bf16.mxu0 0
    %149 = vmatmul.mubr.bf16.gmra.mxu0 %v63
    %v150 = vpop.f32.mrf.mxu0
    %v151 = vadd.f32 %v67, %v150
    %v152 = vpop.f32.mrf.mxu0
    %v153 = vpop.f32.mrf.mxu0
    %v154 = vpop.f32.mrf.mxu0
    %155 = vdwg.mxu0
    %v156 = vmax.f32 %v151, 0.0
    %v157 = vpack.c.bf16 %v156, %v156
    %v158 = vlaneseq
    %v159 = vshrl.u32 %v158, 7
    %v160 = vsub.s32 3, %v159
    %v161 = vrot.slane %v30, %v160
    %v162 = vunpack.c.h.b16 %v47
    %v163 = vunpack.c.h.b16 %v48
    %v164 = vunpack.c.h.b16 %v49
    %v165 = vunpack.c.h.b16 %v50
    %v166 = vunpack.c.h.b16 %v51
    %v167 = vunpack.c.h.b16 %v52
    %v168 = vunpack.c.h.b16 %v53
    %v169 = vunpack.c.h.b16 %v54
    %v170 = vunpack.c.h.b16 %v55
    %v171 = vunpack.c.h.b16 %v56
    %v172 = vunpack.c.h.b16 %v57
    %v173 = vunpack.c.h.b16 %v58
    %v174 = vunpack.c.h.b16 %v59
    %v175 = vunpack.c.h.b16 %v60
    %v176 = vunpack.c.h.b16 %v61
    %v177 = vunpack.c.h.b16 %v62
    %v178 = vpack.c.b16 %v163, %v162
    %v179 = vpack.c.b16 %v165, %v164
    %v180 = vpack.c.b16 %v167, %v166
    %v181 = vpack.c.b16 %v169, %v168
    %v182 = vpack.c.b16 %v171, %v170
    %v183 = vpack.c.b16 %v173, %v172
    %v184 = vpack.c.b16 %v175, %v174
    %v185 = vpack.c.b16 %v177, %v176
    %194 = vmatprep.subr.bf16.mxu0 0
    %195 = vmatpush1.bf16.msra.mxu0 %v185
    %196 = vmatprep.subr.bf16.mxu0 0
    %197 = vmatpush1.bf16.msra.mxu0 %v184
    %198 = vmatprep.subr.bf16.mxu0 0
    %199 = vmatpush1.bf16.msra.mxu0 %v183
    %200 = vmatprep.subr.bf16.mxu0 0
    %201 = vmatpush1.bf16.msra.mxu0 %v182
    %202 = vmatprep.subr.bf16.mxu0 0
    %203 = vmatpush1.bf16.msra.mxu0 %v181
    %204 = vmatprep.subr.bf16.mxu0 0
    %205 = vmatpush1.bf16.msra.mxu0 %v180
    %206 = vmatprep.subr.bf16.mxu0 0
    %207 = vmatpush1.bf16.msra.mxu0 %v179
    %208 = vmatprep.subr.bf16.mxu0 0
    %209 = vmatpush1.bf16.msra.mxu0 %v178
    %210 = vmatprep.subr.bf16.mxu0 0
    %211 = vmatpush2.bf16.msra.mxu0 0
    %212 = vmatprep.subr.bf16.mxu0 0
    %213 = vmatpush2.bf16.msra.mxu0 0
    %214 = vmatprep.subr.bf16.mxu0 0
    %215 = vmatpush2.bf16.msra.mxu0 0
    %216 = vmatprep.subr.bf16.mxu0 0
    %217 = vmatpush2.bf16.msra.mxu0 0
    %218 = vmatprep.subr.bf16.mxu0 0
    %219 = vmatpush2.bf16.msra.mxu0 0
    %220 = vmatprep.subr.bf16.mxu0 0
    %221 = vmatpush2.bf16.msra.mxu0 0
    %222 = vmatprep.subr.bf16.mxu0 0
    %223 = vmatpush2.bf16.msra.mxu0 0
    %224 = vmatprep.subr.bf16.mxu0 0
    %225 = vmatpush2.bf16.msra.mxu0 0
    %226 = vmatprep.mubr.bf16.mxu0 0
    %227 = vmatmul.mubr.bf16.gmra.mxu0 %v157
    %v228 = vpop.f32.mrf.mxu0
    %v229 = vadd.f32 %v161, %v228
    %v230 = vpop.f32.mrf.mxu0
    %v231 = vpop.f32.mrf.mxu0
    %v232 = vpop.f32.mrf.mxu0
    %233 = vdwg.mxu0
    %v234 = vmax.f32 %v229, 0.0
    %v235 = vlaneseq
    %v236 = vshrl.u32 %v235, 7
    %v237 = vsub.s32 4, %v236
    %v238 = vrot.slane %v30, %v237
    %v239 = vmul.f32 %v234, %v238
    %240 = vadd.xlane.f32.xlu0 %v239
    %v241 = vpop.xlane.xlu0 %240
    %vm242 = vcmask 7168
    %243 = vst.msk [vmem:[%s3] sm:$0xff] %vm242, %v241
    // Predicated region
    $region18: #{tpu_custom_call.1} parent=1 // pred_check
      _
    $region19: #{tpu_custom_call.1} parent=1 // pred_check_branch
      %245 = sbr.rel (0) target = $region21
    $region20: #{tpu_custom_call.1} parent=1 // pred_region
      _
    $region21: #{tpu_custom_call.1} parent=1 // pred_fallthru
      _
    // Predicated region
    $region22: #{tpu_custom_call.1} parent=1 // pred_check
      _
    $region23: #{tpu_custom_call.1} parent=1 // pred_check_branch
      %247 = sbr.rel (0) target = $region25
    $region24: #{tpu_custom_call.1} parent=1 // pred_region
      _
    $region25: #{tpu_custom_call.1} parent=1 // pred_fallthru
      _
    %248 = vsyncpa [#allocation3], 1

</llo_original>
